<compile_context>
chip_gen: v7x
topology: tpu7x:2x2x1
jax: 0.10.0
libtpu: 0.0.40
codegen_flags: <defaults>
</compile_context>

<pallas_src>
import functools

import jax
import jax.numpy as jnp
from jax.experimental import pallas as pl
from jax.experimental.pallas import tpu as pltpu

IGNORE_INDEX = 255


def _round_up(x, m):
    return ((x + m - 1) // m) * m


def _loss_kernel(lo_ref, la_ref, lab_ref, out_ref, *, hw, tile_p):
    """Per-tile partial-sum kernel.

    lo_ref  : (1, C, TP) float  -- logits_original tile (classes on sublanes,
                                   pixels on lanes)
    la_ref  : (1, C, TP) float  -- logits_augmented tile
    lab_ref : (1, 1, TP) int    -- labels tile (native dtype, lane-dense)
    out_ref : (1, 1, 1, 128) f32 -- lanes 0..3 = [ce1_sum, ce2_sum, valid_count,
                                    sq_diff_sum], lanes 4..127 = 0
    """
    has_tail = (hw % tile_p) != 0          # static Python branch (hw, tile_p closed over)
    c = lo_ref.shape[1]

    lo = lo_ref[0].astype(jnp.float32)     # (C, TP)
    la = la_ref[0].astype(jnp.float32)     # (C, TP)
    labels = lab_ref[0].astype(jnp.int32)  # (1, TP)

    valid = labels != IGNORE_INDEX         # (1, TP) bool
    if has_tail:
        j = pl.program_id(1)
        pix = jax.lax.broadcasted_iota(jnp.int32, (1, tile_p), 1) + j * tile_p
        in_bounds = pix < hw               # (1, TP) bool
        valid = valid & in_bounds

    cls_idx = jax.lax.broadcasted_iota(jnp.int32, (c, tile_p), 0)   # (C, TP)
    is_tgt = cls_idx == labels                                      # (C, TP) bool

    def ce_sum(x):
        # Class reductions run over the (small) sublane axis; pixels stay on lanes.
        m = jnp.max(x, axis=0, keepdims=True)                              # (1, TP)
        lse = m + jnp.log(jnp.sum(jnp.exp(x - m), axis=0, keepdims=True))  # (1, TP)
        tgt = jnp.sum(jnp.where(is_tgt, x, 0.0), axis=0, keepdims=True)    # (1, TP)
        # Select (not multiply): padded-tail garbage (possibly NaN/Inf) can't leak.
        return jnp.sum(jnp.where(valid, lse - tgt, 0.0), keepdims=True)    # (1, 1)

    ce1_s = ce_sum(lo)
    ce2_s = ce_sum(la)
    nval_s = jnp.sum(valid.astype(jnp.float32), keepdims=True)             # (1, 1)

    diff = la - lo
    if has_tail:
        diff = jnp.where(in_bounds, diff, 0.0)
    sq_s = jnp.sum(diff * diff, keepdims=True)                             # (1, 1)

    # Lane-dense partial row -> unmasked 128-lane store.
    lane = jax.lax.broadcasted_iota(jnp.int32, (1, 128), 1)
    row = (jnp.where(lane == 0, ce1_s, 0.0)
           + jnp.where(lane == 1, ce2_s, 0.0)
           + jnp.where(lane == 2, nval_s, 0.0)
           + jnp.where(lane == 3, sq_s, 0.0))
    out_ref[...] = row.reshape(1, 1, 1, 128)


def _vmem_limit_bytes():
    """Generation-aware scoped-VMEM limit (v7x only has 64 MiB/TC)."""
    cap = 64 * 1024 * 1024
    try:
        cap = pltpu.get_tpu_info().vmem_capacity_bytes
    except Exception:
        pass
    return min(48 * 1024 * 1024, (cap * 5) // 8)


def _pick_tile(hw, c, itemsize, n_batch, vmem_limit):
    """Pixel-tile size: large (amortize ~0.35us/step), VMEM-budgeted with sublane
    padding + label buffers + f32 temporaries, 128-aligned (or the full extent)."""
    if itemsize >= 4:
        c_pad = _round_up(c, 8)
    elif itemsize == 2:
        c_pad = _round_up(c, 16)
    else:
        c_pad = _round_up(c, 32)

    # Per pixel of tile:
    #   2 logits inputs x 2 pipeline buffers x c_pad rows (native dtype)
    # + 2 label pipeline buffers, size-1 sublane dim padded to a native tile (~32 B each)
    # + ~5 (c_pad, tile_p) f32 in-kernel temporaries (upcasts, select, exp, diff)
    bytes_per_pixel = 2 * 2 * c_pad * itemsize + 2 * 32 + 5 * c_pad * 4
    budget = (vmem_limit * 3) // 4                      # headroom for compiler scratch
    max_tile = max(128, (budget // bytes_per_pixel) // 128 * 128)

    if hw <= max_tile:
        tile_p, num_tiles = hw, 1                       # full extent — always legal
    else:
        tile_p = max_tile
        num_tiles = pl.cdiv(hw, tile_p)

    # v7x has 2 TensorCores/chip: make sure there are enough (fully "parallel")
    # grid steps to shard across them for small-batch inputs.
    min_steps = 4
    if n_batch * num_tiles < min_steps and hw >= 2 * 128:
        want_tiles = pl.cdiv(min_steps, n_batch)
        cand = max(128, min(_round_up(pl.cdiv(hw, want_tiles), 128), max_tile))
        tile_p = cand
        num_tiles = pl.cdiv(hw, tile_p)
    return tile_p, num_tiles


def cross_entropy_mse_loss(logits_original, logits_augmented, labels,
                           *, num_classes):
    """logits_*: (N, C, H, W) float; labels: (N, H, W) int (any int dtype, ideally
    uint8). Returns scalar f32."""
    N, C, H, W = logits_original.shape
    assert C == num_classes
    HW = H * W

    # Native-layout reshape only (no transpose, no pad, no label astype): pixels
    # land on the lane (last) axis, classes on sublanes, labels keep their dtype.
    lo = logits_original.reshape(N, C, HW)
    la = logits_augmented.reshape(N, C, HW)
    lab = labels.reshape(N, 1, HW)
    if jnp.dtype(lab.dtype).itemsize > 4:          # e.g. int64 -> int32
        lab = lab.astype(jnp.int32)

    itemsize = jnp.dtype(lo.dtype).itemsize
    lab_itemsize = jnp.dtype(lab.dtype).itemsize
    vmem_limit = _vmem_limit_bytes()
    tile_p, num_tiles = _pick_tile(HW, C, itemsize, N, vmem_limit)

    mse_denom = float(N * C * H * W)               # MSE averages over ALL elements

    kernel = functools.partial(_loss_kernel, hw=HW, tile_p=tile_p)

    cost = pl.CostEstimate(
        flops=12 * N * C * HW,
        transcendentals=2 * N * C * HW,
        bytes_accessed=2 * N * C * HW * itemsize + N * HW * lab_itemsize
        + N * num_tiles * 128 * 4,
    )

    partials = pl.pallas_call(
        kernel,
        out_shape=jax.ShapeDtypeStruct((N, num_tiles, 1, 128), jnp.float32),
        grid_spec=pltpu.PrefetchScalarGridSpec(
            num_scalar_prefetch=0,
            grid=(N, num_tiles),
            in_specs=[
                pl.BlockSpec((1, C, tile_p), lambda b, j: (b, 0, j)),
                pl.BlockSpec((1, C, tile_p), lambda b, j: (b, 0, j)),
                pl.BlockSpec((1, 1, tile_p), lambda b, j: (b, 0, j)),
            ],
            out_specs=pl.BlockSpec((1, 1, 1, 128), lambda b, j: (b, j, 0, 0)),
        ),
        compiler_params=pltpu.CompilerParams(
            dimension_semantics=("parallel", "parallel"),
            vmem_limit_bytes=vmem_limit,
        ),
        cost_estimate=cost,
    )(lo, la, lab)

    # Tiny final combine in JAX (a few KB at most).
    totals = jnp.sum(partials.reshape(-1, 128), axis=0)   # lanes 0..3 hold the sums
    ce_sum = totals[0] + totals[1]
    n_valid = totals[2]
    sq_sum = totals[3]
    return ce_sum / n_valid + sq_sum / mse_denom


def _reference_loss(logits_original, logits_augmented, labels):
    """Pure-JAX reference (mirrors torch.nn.CrossEntropyLoss / MSELoss)."""
    N, C, H, W = logits_original.shape
    lo = jnp.transpose(logits_original, (0, 2, 3, 1)).reshape(-1, C).astype(jnp.float32)
    la = jnp.transpose(logits_augmented, (0, 2, 3, 1)).reshape(-1, C).astype(jnp.float32)
    lab = labels.reshape(-1).astype(jnp.int32)
    valid = lab != IGNORE_INDEX
    safe_lab = jnp.where(valid, lab, 0)

    def ce(x):
        lse = jax.scipy.special.logsumexp(x, axis=-1)
        tgt = jnp.take_along_axis(x, safe_lab[:, None], axis=-1)[:, 0]
        per = jnp.where(valid, lse - tgt, 0.0)
        return jnp.sum(per) / jnp.sum(valid.astype(jnp.float32))

    mse = jnp.mean((la - lo) ** 2)
    return ce(lo) + ce(la) + mse


if __name__ == "__main__":
    key = jax.random.PRNGKey(0)
    k1, k2, k3, k4 = jax.random.split(key, 4)

    N, C, H, W = 2, 4, 16, 16  # num_classes = 4
    logits_original = jax.random.normal(k1, (N, C, H, W), dtype=jnp.float32)
    logits_augmented = logits_original + 0.1 * jax.random.normal(
        k2, (N, C, H, W), dtype=jnp.float32)

    labels = jax.random.randint(k3, (N, H, W), 0, C, dtype=jnp.int32)
    ignore_mask = jax.random.uniform(k4, (N, H, W)) < 0.1   # sprinkle ignore_index
    # Ship labels as uint8 (classes and IGNORE_INDEX=255 fit) -> 4x less HBM traffic.
    labels = jnp.where(ignore_mask, IGNORE_INDEX, labels).astype(jnp.uint8)

    loss = cross_entropy_mse_loss(
        logits_original, logits_augmented, labels, num_classes=C)
    loss = jax.block_until_ready(loss)

    ref = jax.block_until_ready(
        _reference_loss(logits_original, logits_augmented, labels))
    assert jnp.allclose(loss, ref, rtol=1e-5, atol=1e-5), (loss, ref)

    print("KERNEL_OK")
</pallas_src>

<mosaic_0001>
module attributes {stable_mosaic.version = 11 : i64} {
  func.func @_loss_kernel(%arg0: i32, %arg1: i32, %arg2: memref<1x4x128xf32, #tpu.memory_space<vmem>>, %arg3: memref<1x4x128xf32, #tpu.memory_space<vmem>>, %arg4: memref<1x1x128xi8, #tpu.memory_space<vmem>>, %arg5: memref<1x1x1x128xf32, #tpu.memory_space<vmem>>) attributes {dimension_semantics = [#tpu.dimension_semantics<parallel>, #tpu.dimension_semantics<parallel>], iteration_bounds = array<i64: 2, 2>, scalar_prefetch = 0 : i64, scratch_operands = 0 : i64, tpu.core_type = #tpu.core_type<tc>, window_params = [{transform_indices = @transform_0, window_bounds = array<i64: 1, 4, 128>}, {transform_indices = @transform_1, window_bounds = array<i64: 1, 4, 128>}, {transform_indices = @transform_2, window_bounds = array<i64: 1, 1, 128>}, {transform_indices = @transform_3, window_bounds = array<i64: 1, 1, 1, 128>}]} {
    %c0 = arith.constant 0 : index
    %c0_0 = arith.constant 0 : index
    %c0_1 = arith.constant 0 : index
    %0 = vector.load %arg2[%c0, %c0_0, %c0_1] : memref<1x4x128xf32, #tpu.memory_space<vmem>>, vector<1x4x128xf32>
    %1 = vector.shape_cast %0 : vector<1x4x128xf32> to vector<4x128xf32>
    %c0_2 = arith.constant 0 : index
    %c0_3 = arith.constant 0 : index
    %c0_4 = arith.constant 0 : index
    %2 = vector.load %arg3[%c0_2, %c0_3, %c0_4] : memref<1x4x128xf32, #tpu.memory_space<vmem>>, vector<1x4x128xf32>
    %3 = vector.shape_cast %2 : vector<1x4x128xf32> to vector<4x128xf32>
    %c0_5 = arith.constant 0 : index
    %c0_6 = arith.constant 0 : index
    %c0_7 = arith.constant 0 : index
    %4 = vector.load %arg4[%c0_5, %c0_6, %c0_7] : memref<1x1x128xi8, #tpu.memory_space<vmem>>, vector<1x1x128xi8>
    %5 = vector.shape_cast %4 : vector<1x1x128xi8> to vector<1x128xi8>
    %6 = arith.extui %5 : vector<1x128xi8> to vector<1x128xi32>
    %c255_i32 = arith.constant 255 : i32
    %7 = vector.broadcast %c255_i32 : i32 to vector<1x128xi32>
    %8 = arith.cmpi ne, %6, %7 : vector<1x128xi32>
    %9 = tpu.iota {dimensions = array<i32: 0>} : vector<4x128xi32>
    %10 = vector.broadcast %6 : vector<1x128xi32> to vector<4x128xi32>
    %11 = arith.cmpi eq, %9, %10 : vector<4x128xi32>
    %cst = arith.constant dense<0xFF800000> : vector<128xf32>
    %12 = vector.multi_reduction <maximumf>, %1, %cst [0] : vector<4x128xf32> to vector<128xf32>
    %13 = vector.shape_cast %12 : vector<128xf32> to vector<1x128xf32>
    %14 = vector.broadcast %13 : vector<1x128xf32> to vector<4x128xf32>
    %15 = arith.subf %1, %14 : vector<4x128xf32>
    %16 = math.exp %15 : vector<4x128xf32>
    %cst_8 = arith.constant dense<0.000000e+00> : vector<128xf32>
    %17 = vector.multi_reduction <add>, %16, %cst_8 [0] : vector<4x128xf32> to vector<128xf32>
    %18 = vector.shape_cast %17 : vector<128xf32> to vector<1x128xf32>
    %19 = math.log %18 : vector<1x128xf32>
    %20 = arith.addf %13, %19 : vector<1x128xf32>
    %cst_9 = arith.constant 0.000000e+00 : f32
    %21 = vector.broadcast %cst_9 : f32 to vector<4x128xf32>
    %22 = arith.select %11, %1, %21 : vector<4x128xi1>, vector<4x128xf32>
    %cst_10 = arith.constant dense<0.000000e+00> : vector<128xf32>
    %23 = vector.multi_reduction <add>, %22, %cst_10 [0] : vector<4x128xf32> to vector<128xf32>
    %24 = vector.shape_cast %23 : vector<128xf32> to vector<1x128xf32>
    %25 = arith.subf %20, %24 : vector<1x128xf32>
    %cst_11 = arith.constant 0.000000e+00 : f32
    %26 = vector.broadcast %cst_11 : f32 to vector<1x128xf32>
    %27 = arith.select %8, %25, %26 : vector<1x128xi1>, vector<1x128xf32>
    %28 = vector.shape_cast %27 : vector<1x128xf32> to vector<1x1x128xf32>
    %cst_12 = arith.constant dense<0.000000e+00> : vector<1xf32>
    %29 = vector.multi_reduction <add>, %28, %cst_12 [1, 2] : vector<1x1x128xf32> to vector<1xf32>
    %30 = vector.shape_cast %29 : vector<1xf32> to vector<1x1x1xf32>
    %31 = vector.extract %30[0, 0, 0] : f32 from vector<1x1x1xf32>
    %32 = vector.broadcast %31 : f32 to vector<1x1xf32>
    %cst_13 = arith.constant dense<0xFF800000> : vector<128xf32>
    %33 = vector.multi_reduction <maximumf>, %3, %cst_13 [0] : vector<4x128xf32> to vector<128xf32>
    %34 = vector.shape_cast %33 : vector<128xf32> to vector<1x128xf32>
    %35 = vector.broadcast %34 : vector<1x128xf32> to vector<4x128xf32>
    %36 = arith.subf %3, %35 : vector<4x128xf32>
    %37 = math.exp %36 : vector<4x128xf32>
    %cst_14 = arith.constant dense<0.000000e+00> : vector<128xf32>
    %38 = vector.multi_reduction <add>, %37, %cst_14 [0] : vector<4x128xf32> to vector<128xf32>
    %39 = vector.shape_cast %38 : vector<128xf32> to vector<1x128xf32>
    %40 = math.log %39 : vector<1x128xf32>
    %41 = arith.addf %34, %40 : vector<1x128xf32>
    %cst_15 = arith.constant 0.000000e+00 : f32
    %42 = vector.broadcast %cst_15 : f32 to vector<4x128xf32>
    %43 = arith.select %11, %3, %42 : vector<4x128xi1>, vector<4x128xf32>
    %cst_16 = arith.constant dense<0.000000e+00> : vector<128xf32>
    %44 = vector.multi_reduction <add>, %43, %cst_16 [0] : vector<4x128xf32> to vector<128xf32>
    %45 = vector.shape_cast %44 : vector<128xf32> to vector<1x128xf32>
    %46 = arith.subf %41, %45 : vector<1x128xf32>
    %cst_17 = arith.constant 0.000000e+00 : f32
    %47 = vector.broadcast %cst_17 : f32 to vector<1x128xf32>
    %48 = arith.select %8, %46, %47 : vector<1x128xi1>, vector<1x128xf32>
    %49 = vector.shape_cast %48 : vector<1x128xf32> to vector<1x1x128xf32>
    %cst_18 = arith.constant dense<0.000000e+00> : vector<1xf32>
    %50 = vector.multi_reduction <add>, %49, %cst_18 [1, 2] : vector<1x1x128xf32> to vector<1xf32>
    %51 = vector.shape_cast %50 : vector<1xf32> to vector<1x1x1xf32>
    %52 = vector.extract %51[0, 0, 0] : f32 from vector<1x1x1xf32>
    %53 = vector.broadcast %52 : f32 to vector<1x1xf32>
    %54 = arith.extui %8 : vector<1x128xi1> to vector<1x128xi32>
    %55 = arith.sitofp %54 : vector<1x128xi32> to vector<1x128xf32>
    %56 = vector.shape_cast %55 : vector<1x128xf32> to vector<1x1x128xf32>
    %cst_19 = arith.constant dense<0.000000e+00> : vector<1xf32>
    %57 = vector.multi_reduction <add>, %56, %cst_19 [1, 2] : vector<1x1x128xf32> to vector<1xf32>
    %58 = vector.shape_cast %57 : vector<1xf32> to vector<1x1x1xf32>
    %59 = vector.extract %58[0, 0, 0] : f32 from vector<1x1x1xf32>
    %60 = vector.broadcast %59 : f32 to vector<1x1xf32>
    %61 = arith.subf %3, %1 : vector<4x128xf32>
    %62 = arith.mulf %61, %61 : vector<4x128xf32>
    %63 = vector.shape_cast %62 : vector<4x128xf32> to vector<1x4x128xf32>
    %cst_20 = arith.constant dense<0.000000e+00> : vector<1xf32>
    %64 = vector.multi_reduction <add>, %63, %cst_20 [1, 2] : vector<1x4x128xf32> to vector<1xf32>
    %65 = vector.shape_cast %64 : vector<1xf32> to vector<1x1x1xf32>
    %66 = vector.extract %65[0, 0, 0] : f32 from vector<1x1x1xf32>
    %67 = vector.broadcast %66 : f32 to vector<1x1xf32>
    %68 = tpu.iota {dimensions = array<i32: 1>} : vector<1x128xi32>
    %c0_i32 = arith.constant 0 : i32
    %69 = vector.broadcast %c0_i32 : i32 to vector<1x128xi32>
    %70 = arith.cmpi eq, %68, %69 : vector<1x128xi32>
    %cst_21 = arith.constant 0.000000e+00 : f32
    %71 = vector.shape_cast %32 : vector<1x1xf32> to vector<1x1xf32>
    %72 = vector.broadcast %71 : vector<1x1xf32> to vector<1x128xf32>
    %73 = vector.broadcast %cst_21 : f32 to vector<1x128xf32>
    %74 = arith.select %70, %72, %73 : vector<1x128xi1>, vector<1x128xf32>
    %c1_i32 = arith.constant 1 : i32
    %75 = vector.broadcast %c1_i32 : i32 to vector<1x128xi32>
    %76 = arith.cmpi eq, %68, %75 : vector<1x128xi32>
    %cst_22 = arith.constant 0.000000e+00 : f32
    %77 = vector.shape_cast %53 : vector<1x1xf32> to vector<1x1xf32>
    %78 = vector.broadcast %77 : vector<1x1xf32> to vector<1x128xf32>
    %79 = vector.broadcast %cst_22 : f32 to vector<1x128xf32>
    %80 = arith.select %76, %78, %79 : vector<1x128xi1>, vector<1x128xf32>
    %81 = arith.addf %74, %80 : vector<1x128xf32>
    %c2_i32 = arith.constant 2 : i32
    %82 = vector.broadcast %c2_i32 : i32 to vector<1x128xi32>
    %83 = arith.cmpi eq, %68, %82 : vector<1x128xi32>
    %cst_23 = arith.constant 0.000000e+00 : f32
    %84 = vector.shape_cast %60 : vector<1x1xf32> to vector<1x1xf32>
    %85 = vector.broadcast %84 : vector<1x1xf32> to vector<1x128xf32>
    %86 = vector.broadcast %cst_23 : f32 to vector<1x128xf32>
    %87 = arith.select %83, %85, %86 : vector<1x128xi1>, vector<1x128xf32>
    %88 = arith.addf %81, %87 : vector<1x128xf32>
    %c3_i32 = arith.constant 3 : i32
    %89 = vector.broadcast %c3_i32 : i32 to vector<1x128xi32>
    %90 = arith.cmpi eq, %68, %89 : vector<1x128xi32>
    %cst_24 = arith.constant 0.000000e+00 : f32
    %91 = vector.shape_cast %67 : vector<1x1xf32> to vector<1x1xf32>
    %92 = vector.broadcast %91 : vector<1x1xf32> to vector<1x128xf32>
    %93 = vector.broadcast %cst_24 : f32 to vector<1x128xf32>
    %94 = arith.select %90, %92, %93 : vector<1x128xi1>, vector<1x128xf32>
    %95 = arith.addf %88, %94 : vector<1x128xf32>
    %96 = vector.shape_cast %95 : vector<1x128xf32> to vector<1x1x1x128xf32>
    %c0_25 = arith.constant 0 : index
    %c0_26 = arith.constant 0 : index
    %c0_27 = arith.constant 0 : index
    %c0_28 = arith.constant 0 : index
    %97 = vector.load %arg5[%c0_25, %c0_26, %c0_27, %c0_28] : memref<1x1x1x128xf32, #tpu.memory_space<vmem>>, vector<1x1x1x128xf32>
    tpu.vector_store %arg5[%c0_25, %c0_26, %c0_27, %c0_28], %96 {strides = array<i32>} : memref<1x1x1x128xf32, #tpu.memory_space<vmem>>, vector<1x1x1x128xf32>,
    return
  }
  func.func @transform_0(%arg0: i32, %arg1: i32) -> (i32, i32, i32) {
    %c0_i32 = arith.constant 0 : i32
    %c0_i32_0 = arith.constant 0 : i32
    return %arg0, %c0_i32, %arg1 : i32, i32, i32
  }
  func.func @transform_1(%arg0: i32, %arg1: i32) -> (i32, i32, i32) {
    %c0_i32 = arith.constant 0 : i32
    %c0_i32_0 = arith.constant 0 : i32
    return %arg0, %c0_i32, %arg1 : i32, i32, i32
  }
  func.func @transform_2(%arg0: i32, %arg1: i32) -> (i32, i32, i32) {
    %c0_i32 = arith.constant 0 : i32
    %c0_i32_0 = arith.constant 0 : i32
    return %arg0, %c0_i32, %arg1 : i32, i32, i32
  }
  func.func @transform_3(%arg0: i32, %arg1: i32) -> (i32, i32, i32, i32) {
    %c0_i32 = arith.constant 0 : i32
    %c0_i32_0 = arith.constant 0 : i32
    %c0_i32_1 = arith.constant 0 : i32
    return %arg0, %arg1, %c0_i32, %c0_i32_0 : i32, i32, i32, i32
  }
}

</mosaic_0001>

<llo_original>
// kernel: tpu_custom_call.1
$region0: #{tpu_custom_call.1}
  #allocation0 [shape = 'u32[]', space=smem, size = 0x4, offset = 0x4, fixed_abs, tag = 'smem constant byte address 0x4 - core index']
  #allocation1 [shape = 'u32[144,128]{1,0:T(1,128)}', space=vmem, size = 0x12000, scoped, tag = 'internal scratch']
  %s0 = inlined_call_operand.hbm [shape: f32[2,4,256], index: 0, kind: input, shape index: {}]
  %s1 = inlined_call_operand.hbm [shape: f32[2,4,256], index: 1, kind: input, shape index: {}]
  %s2 = inlined_call_operand.vmem [shape: u8[2,1,256], index: 2, kind: input, shape index: {}]
  %s3 = inlined_call_operand.hbm [shape: f32[2,2,1,128], index: 3, kind: output, shape index: {}]
  %s4 = sld [smem:[#allocation0]]
  $region53: #{tpu_custom_call.1} parent=0
    _
  %s6 = ssub.s32 1, %s4
  %s7 = scalar_select 0, %s6, %s4
  $region1: #{tpu_custom_call.1} parent=0
    #allocation2 [shape = 'u8[4096]{0}', space=vmem, size = 0x1000, scoped, tag = 'input window, operand 0']
    #allocation3 [shape = 's32[2]{0}', space=sflag, size = 0x8, scoped, tag = 'scoped memory for tpu_custom_call.1']
    #allocation4 [shape = 's32[2]{0}', space=sflag, size = 0x8, scoped, tag = 'scoped memory for tpu_custom_call.1']
    #allocation5 [shape = 'u8[4096]{0}', space=vmem, size = 0x1000, scoped, tag = 'input window, operand 1']
    #allocation6 [shape = 's32[2]{0}', space=sflag, size = 0x8, scoped, tag = 'scoped memory for tpu_custom_call.1']
    #allocation7 [shape = 'u8[1024]{0}', space=vmem, size = 0x400, scoped, tag = 'output window, operand 0']
    %8 = vsyncpa [#allocation3], 0
    %s9 = scalar_lea.sflag [#allocation3], 1
    %10 = vsyncpa %s9, 0
    %11 = vsyncpa [#allocation6], 0
    %s12 = scalar_lea.sflag [#allocation6], 1
    %13 = vsyncpa %s12, 0
    %14 = vsyncpa [#allocation4], 0
    %s15 = scalar_lea.sflag [#allocation4], 1
    %16 = vsyncpa %s15, 0
    loop: start=0, step=1, limit=6
    $region2: #{tpu_custom_call.1} parent=1 // loop_pre_header
      _
    $region3: #{tpu_custom_call.1} parent=1 // loop_header
      %s18 = sphi 0, %s22
      %p19 = scmp.ge.s32.totalorder %s18, 6
      %s25 = sphi 0, %s37
      %s26 = sphi 0, %s33
      %s27 = sphi 0, %s25
      %s28 = sphi 0, %s26
      %s29 = sphi 0, %s27
      %s30 = sphi 0, %s28
      %s42 = sphi 0, %s44
      %s45 = sphi 0, %s42
      %s46 = sphi 0, %s45
      %s62 = sphi 0, %s46
      %s70 = sphi 0, %s72
      %s73 = sphi 0, %s70
      %s74 = sphi 0, %s73
      %s90 = sphi 0, %s74
      %s98 = sphi 0, %s100
      %s101 = sphi 0, %s98
      %s102 = sphi 0, %s101
      %s118 = sphi 0, %s102
      %s126 = sphi 0, %s128
      %s129 = sphi 0, %s126
      %s130 = sphi 0, %s129
      %s146 = sphi 0, %s130
    $region4: #{tpu_custom_call.1} parent=1 // loop_header_branch
      %21 = sbr.rel (%p19) target = $region8
    $region5: #{tpu_custom_call.1} parent=1 // loop_body
      %s23 = ssub.s32 %s18, 1
      %s24 = ssub.s32 %s18, 2
      %s31 = sadd.s32 1, %s26
      %p32 = scmp.ge.s32.totalorder %s31, 2
      %s33 = scalar_select %p32, 0, %s31
      %s34 = sadd.s32 1, %s25
      %s35 = scalar_select %p32, %s34, %s25
      %p36 = scmp.ge.s32.totalorder %s35, 2
      %s37 = scalar_select %p36, 0, %s35
      %s38 = ssub.s32 %s25, %s37
      %s39 = ssub.s32 %s26, %s33
      %s40 = sor.u32 %s38, %s39
      %p41 = scmp.eq.s32.totalorder %s40, 0
      %s43 = sadd.s32 %s42, 1
      %s44 = scalar_select %p41, %s42, %s43
      %p47 = pneg %p41
      %p48 = scmp.eq.s32.totalorder %s18, 3
      %p49 = por %p47, %p48
      %p50 = scmp.ne.s32.totalorder %s42, %s45
      %p51 = scmp.eq.s32.totalorder %s18, 0
      %p52 = por %p50, %p51
      %p53 = scmp.ne.s32.totalorder %s42, %s45
      %p54 = scmp.eq.s32.totalorder %s23, 3
      %p55 = por %p53, %p54
      %p56 = scmp.ne.s32.totalorder %s45, %s46
      %p57 = scmp.eq.s32.totalorder %s23, 0
      %p58 = por %p56, %p57
      %p59 = scmp.ne.s32.totalorder %s45, %s46
      %p60 = scmp.eq.s32.totalorder %s24, 3
      %p61 = por %p59, %p60
      %p63 = scmp.ne.s32.totalorder %s46, %s62
      %p64 = scmp.eq.s32.totalorder %s24, 0
      %p65 = por %p63, %p64
      %s66 = ssub.s32 %s25, %s37
      %s67 = ssub.s32 %s26, %s33
      %s68 = sor.u32 %s66, %s67
      %p69 = scmp.eq.s32.totalorder %s68, 0
      %s71 = sadd.s32 %s70, 1
      %s72 = scalar_select %p69, %s70, %s71
      %p75 = pneg %p69
      %p76 = scmp.eq.s32.totalorder %s18, 3
      %p77 = por %p75, %p76
      %p78 = scmp.ne.s32.totalorder %s70, %s73
      %p79 = scmp.eq.s32.totalorder %s18, 0
      %p80 = por %p78, %p79
      %p81 = scmp.ne.s32.totalorder %s70, %s73
      %p82 = scmp.eq.s32.totalorder %s23, 3
      %p83 = por %p81, %p82
      %p84 = scmp.ne.s32.totalorder %s73, %s74
      %p85 = scmp.eq.s32.totalorder %s23, 0
      %p86 = por %p84, %p85
      %p87 = scmp.ne.s32.totalorder %s73, %s74
      %p88 = scmp.eq.s32.totalorder %s24, 3
      %p89 = por %p87, %p88
      %p91 = scmp.ne.s32.totalorder %s74, %s90
      %p92 = scmp.eq.s32.totalorder %s24, 0
      %p93 = por %p91, %p92
      %s94 = ssub.s32 %s25, %s37
      %s95 = ssub.s32 %s26, %s33
      %s96 = sor.u32 %s94, %s95
      %p97 = scmp.eq.s32.totalorder %s96, 0
      %s99 = sadd.s32 %s98, 1
      %s100 = scalar_select %p97, %s98, %s99
      %p103 = pneg %p97
      %p104 = scmp.eq.s32.totalorder %s18, 3
      %p105 = por %p103, %p104
      %p106 = scmp.ne.s32.totalorder %s98, %s101
      %p107 = scmp.eq.s32.totalorder %s18, 0
      %p108 = por %p106, %p107
      %p109 = scmp.ne.s32.totalorder %s98, %s101
      %p110 = scmp.eq.s32.totalorder %s23, 3
      %p111 = por %p109, %p110
      %p112 = scmp.ne.s32.totalorder %s101, %s102
      %p113 = scmp.eq.s32.totalorder %s23, 0
      %p114 = por %p112, %p113
      %p115 = scmp.ne.s32.totalorder %s101, %s102
      %p116 = scmp.eq.s32.totalorder %s24, 3
      %p117 = por %p115, %p116
      %p119 = scmp.ne.s32.totalorder %s102, %s118
      %p120 = scmp.eq.s32.totalorder %s24, 0
      %p121 = por %p119, %p120
      %s122 = ssub.s32 %s25, %s37
      %s123 = ssub.s32 %s26, %s33
      %s124 = sor.u32 %s122, %s123
      %p125 = scmp.eq.s32.totalorder %s124, 0
      %s127 = sadd.s32 %s126, 1
      %s128 = scalar_select %p125, %s126, %s127
      %p131 = pneg %p125
      %p132 = scmp.eq.s32.totalorder %s18, 3
      %p133 = por %p131, %p132
      %p134 = scmp.ne.s32.totalorder %s126, %s129
      %p135 = scmp.eq.s32.totalorder %s18, 0
      %p136 = por %p134, %p135
      %p137 = scmp.ne.s32.totalorder %s126, %s129
      %p138 = scmp.eq.s32.totalorder %s23, 3
      %p139 = por %p137, %p138
      %p140 = scmp.ne.s32.totalorder %s129, %s130
      %p141 = scmp.eq.s32.totalorder %s23, 0
      %p142 = por %p140, %p141
      %p143 = scmp.ne.s32.totalorder %s129, %s130
      %p144 = scmp.eq.s32.totalorder %s24, 3
      %p145 = por %p143, %p144
      %p147 = scmp.ne.s32.totalorder %s130, %s146
      %p148 = scmp.eq.s32.totalorder %s24, 0
      %p149 = por %p147, %p148
      %p150 = scmp.le.s32.totalorder 1, %s18
      %p151 = scmp.lt.s32.totalorder %s18, 5
      %p152 = pnand %p150, %p151
      %p153 = pneg %p152
      // Predicated region
      $region9: #{tpu_custom_call.1} parent=5 // pred_check
        _
      $region10: #{tpu_custom_call.1} parent=5 // pred_check_branch
        %155 = sbr.rel (%p152) target = $region12
      $region11: #{tpu_custom_call.1} parent=5 // pred_region
        %s156 = ssub.s32 %s18, 1
      $region12: #{tpu_custom_call.1} parent=5 // pred_fallthru
        _
      %p157 = scmp.lt.s32.totalorder %s18, 4
      // Predicated region
      $region13: #{tpu_custom_call.1} parent=5 // pred_check
        %p158 = pneg %p157
      $region14: #{tpu_custom_call.1} parent=5 // pred_check_branch
        %160 = sbr.rel (%p158) target = $region16
      $region15: #{tpu_custom_call.1} parent=5 // pred_region
        // Predicated region
        $region17: #{tpu_custom_call.1} parent=15 // pred_check
          %p161 = pneg %p52
        $region18: #{tpu_custom_call.1} parent=15 // pred_check_branch
          %163 = sbr.rel (%p161) target = $region20
        $region19: #{tpu_custom_call.1} parent=15 // pred_region
          %s164 = sand.u32 %s42, 1
          %s165 = scalar_lea.sflag [#allocation3], %s164
          %s166 = sand.u32 %s42, 1
          %s167 = smul.addr %s166, 4
          %s168 = scalar_lea.vmem [#allocation2], %s167
          %s170 = ssub.s32 64, 64
          %171 = vsyncadd %s165, %s170
          %s172 = smul.addr %s25, 2
          %s173 = sadd.s32 %s26, %s172
          %s174 = smul.addr %s173, 64
          %s175 = scalar_lea.hbm %s0, %s174
          %s177 = sshll.u32 %s168, 4
          %s178 = int_to_ptr.vmem [resolvable:$true] %s177
          %180 = dma.hbm_to_vmem [thread:$0]  %s175, 64, %s178, %s165
        $region20: #{tpu_custom_call.1} parent=15 // pred_fallthru
          _
        // Predicated region
        $region21: #{tpu_custom_call.1} parent=15 // pred_check
          %p181 = pneg %p80
        $region22: #{tpu_custom_call.1} parent=15 // pred_check_branch
          %183 = sbr.rel (%p181) target = $region24
        $region23: #{tpu_custom_call.1} parent=15 // pred_region
          %s184 = sand.u32 %s70, 1
          %s185 = scalar_lea.sflag [#allocation6], %s184
          %s186 = sand.u32 %s70, 1
          %s187 = smul.addr %s186, 4
          %s188 = scalar_lea.vmem [#allocation5], %s187
          %s190 = ssub.s32 64, 64
          %191 = vsyncadd %s185, %s190
          %s192 = smul.addr %s25, 2
          %s193 = sadd.s32 %s26, %s192
          %s194 = smul.addr %s193, 64
          %s195 = scalar_lea.hbm %s1, %s194
          %s197 = sshll.u32 %s188, 4
          %s198 = int_to_ptr.vmem [resolvable:$true] %s197
          %200 = dma.hbm_to_vmem [thread:$0]  %s195, 64, %s198, %s185
        $region24: #{tpu_custom_call.1} parent=15 // pred_fallthru
          _
        // Predicated region
        $region25: #{tpu_custom_call.1} parent=15 // pred_check
          %p201 = pneg %p108
        $region26: #{tpu_custom_call.1} parent=15 // pred_check_branch
          %203 = sbr.rel (%p201) target = $region28
        $region27: #{tpu_custom_call.1} parent=15 // pred_region
          %p204 = scmp.lt.s32.totalorder %s25, 1
          %s205 = scalar_select %p204, %s25, 1
          %p206 = scmp.lt.s32.totalorder %s26, 1
          %s207 = scalar_select %p206, %s26, 1
          %s208 = smul.addr %s205, 2
          %s209 = sadd.s32 %s207, %s208
          %s210 = scalar_lea.vmem %s2, %s209
        $region28: #{tpu_custom_call.1} parent=15 // pred_fallthru
          _
      $region16: #{tpu_custom_call.1} parent=5 // pred_fallthru
        _
      %p211 = scmp.le.s32.totalorder 1, %s18
      %p212 = scmp.lt.s32.totalorder %s18, 5
      %p213 = pnand %p211, %p212
      %p214 = pneg %p213
      // Predicated region
      $region29: #{tpu_custom_call.1} parent=5 // pred_check
        _
      $region30: #{tpu_custom_call.1} parent=5 // pred_check_branch
        %216 = sbr.rel (%p213) target = $region32
      $region31: #{tpu_custom_call.1} parent=5 // pred_region
        %s217 = ssub.s32 %s18, 1
        %s218 = sand.u32 %s45, 1
        %s219 = scalar_lea.sflag [#allocation3], %s218
        %s220 = sand.u32 %s45, 1
        %s221 = smul.addr %s220, 4
        %s222 = scalar_lea.vmem [#allocation2], %s221
        // Predicated region
        $region33: #{tpu_custom_call.1} parent=31 // pred_check
          %p223 = pneg %p58
        $region34: #{tpu_custom_call.1} parent=31 // pred_check_branch
          %225 = sbr.rel (%p223) target = $region36
        $region35: #{tpu_custom_call.1} parent=31 // pred_region
          %226 = dma.done %s219, 64
        $region36: #{tpu_custom_call.1} parent=31 // pred_fallthru
          _
        %s227 = sand.u32 %s73, 1
        %s228 = scalar_lea.sflag [#allocation6], %s227
        %s229 = sand.u32 %s73, 1
        %s230 = smul.addr %s229, 4
        %s231 = scalar_lea.vmem [#allocation5], %s230
        // Predicated region
        $region37: #{tpu_custom_call.1} parent=31 // pred_check
          %p232 = pneg %p86
        $region38: #{tpu_custom_call.1} parent=31 // pred_check_branch
          %234 = sbr.rel (%p232) target = $region40
        $region39: #{tpu_custom_call.1} parent=31 // pred_region
          %235 = dma.done %s228, 64
        $region40: #{tpu_custom_call.1} parent=31 // pred_fallthru
          _
        %s236 = sand.u32 %s45, 1
        %s237 = scalar_lea.sflag [#allocation3], %s236
        %s238 = sand.u32 %s45, 1
        %s239 = smul.addr %s238, 4
        %s240 = scalar_lea.vmem [#allocation2], %s239
        %p241 = pneg %p58
        %p242 = pneg %p55
        %s243 = sand.u32 %s73, 1
        %s244 = scalar_lea.sflag [#allocation6], %s243
        %s245 = sand.u32 %s73, 1
        %s246 = smul.addr %s245, 4
        %s247 = scalar_lea.vmem [#allocation5], %s246
        %p248 = pneg %p86
        %p249 = pneg %p83
        %p250 = scmp.lt.s32.totalorder %s27, 1
        %s251 = scalar_select %p250, %s27, 1
        %p252 = scmp.lt.s32.totalorder %s28, 1
        %s253 = scalar_select %p252, %s28, 1
        %s254 = smul.addr %s251, 2
        %s255 = sadd.s32 %s253, %s254
        %s256 = scalar_lea.vmem %s2, %s255
        %p257 = pneg %p114
        %p258 = pneg %p111
        %p259 = pneg %p142
        %p260 = pneg %p139
        %s261 = sand.u32 %s129, 1
        %s262 = scalar_lea.sflag [#allocation4], %s261
        %s263 = sand.u32 %s129, 1
        %s264 = scalar_lea.vmem [#allocation7], %s263
        %p265 = scmp.lt.s32.totalorder %s27, 1
        %s266 = scalar_select %p265, %s27, 1
        %p267 = scmp.lt.s32.totalorder %s28, 1
        %s268 = scalar_select %p267, %s28, 1
        %s269 = smul.addr %s266, 2
        %s270 = sadd.s32 %s268, %s269
        %s271 = scalar_lea.vmem %s2, %s270
        %v272 = vld [vmem:[%s222] sm:$0xf]
        %v273 = vld [vmem:[%s231] sm:$0xf]
        %v274 = vld [vmem:[%s271] sm:$0x1]
        %v275 = vunpack.c.0.s8 %v274
        %v276 = vand.u32 %v275, 255
        %vm277 = vcmp.ne.s32.totalorder %v276, 255
        %v278 = vlaneseq
        %v279 = vshrl.u32 %v278, 7
        %v280 = vlaneseq
        %v281 = vshrl.u32 %v280, 7
        %v282 = vsub.s32 0, %v281
        %v283 = vrot.slane %v276, %v282
        %vm284 = vcmp.eq.s32.totalorder %v279, %v283
        %vm285 = vcmask 1043456
        %v286 = vsel %vm285, %v272, -inf
        %v287 = vrot.slane %v286, 4
        %v288 = vmax.f32 %v286, %v287
        %v289 = vrot.slane %v288, 2
        %v290 = vmax.f32 %v288, %v289
        %v291 = vrot.slane %v290, 1
        %v292 = vmax.f32 %v290, %v291
        %v293 = vsub.f32 %v272, %v292
        %v294 = vmul.f32 %v293, 1.442695
        %v295 = vpow.pop %v294
        %v296 = vsel %vm285, %v295, 0.0
        %v297 = vrot.slane %v296, 4
        %v298 = vadd.f32 %v296, %v297
        %v299 = vrot.slane %v298, 2
        %v300 = vadd.f32 %v298, %v299
        %v301 = vrot.slane %v300, 1
        %v302 = vadd.f32 %v300, %v301
        %v303 = vlog2.pop %v302
        %v304 = vmul.f32 %v303, 0.6931472
        %v305 = vadd.f32 %v292, %v304
        %v306 = vsel %vm284, %v272, 0.0
        %v307 = vsel %vm285, %v306, 0.0
        %v308 = vrot.slane %v307, 4
        %v309 = vadd.f32 %v307, %v308
        %v310 = vrot.slane %v309, 2
        %v311 = vadd.f32 %v309, %v310
        %v312 = vrot.slane %v311, 1
        %v313 = vadd.f32 %v311, %v312
        %v314 = vsub.f32 %v305, %v313
        %v315 = vsel %vm277, %v314, 0.0
        %vm316 = vcmask 1040384
        %v317 = vsel %vm316, %v315, 0.0
        %318 = vadd.xlane.f32.xlu0 %v317
        %v319 = vpop.xlane.xlu0 %318
        %v320 = vrot.slane %v319, 4
        %v321 = vadd.f32 %v319, %v320
        %v322 = vrot.slane %v321, 2
        %v323 = vadd.f32 %v321, %v322
        %v324 = vrot.slane %v323, 1
        %v325 = vadd.f32 %v323, %v324
        %s326 = vtos %v325
        %v327 = vsel %vm285, %v273, -inf
        %v328 = vrot.slane %v327, 4
        %v329 = vmax.f32 %v327, %v328
        %v330 = vrot.slane %v329, 2
        %v331 = vmax.f32 %v329, %v330
        %v332 = vrot.slane %v331, 1
        %v333 = vmax.f32 %v331, %v332
        %v334 = vsub.f32 %v273, %v333
        %v335 = vmul.f32 %v334, 1.442695
        %v336 = vpow.pop %v335
        %v337 = vsel %vm285, %v336, 0.0
        %v338 = vrot.slane %v337, 4
        %v339 = vadd.f32 %v337, %v338
        %v340 = vrot.slane %v339, 2
        %v341 = vadd.f32 %v339, %v340
        %v342 = vrot.slane %v341, 1
        %v343 = vadd.f32 %v341, %v342
        %v344 = vlog2.pop %v343
        %v345 = vmul.f32 %v344, 0.6931472
        %v346 = vadd.f32 %v333, %v345
        %v347 = vsel %vm284, %v273, 0.0
        %v348 = vsel %vm285, %v347, 0.0
        %v349 = vrot.slane %v348, 4
        %v350 = vadd.f32 %v348, %v349
        %v351 = vrot.slane %v350, 2
        %v352 = vadd.f32 %v350, %v351
        %v353 = vrot.slane %v352, 1
        %v354 = vadd.f32 %v352, %v353
        %v355 = vsub.f32 %v346, %v354
        %v356 = vsel %vm277, %v355, 0.0
        %v357 = vsel %vm316, %v356, 0.0
        %358 = vadd.xlane.f32.xlu0 %v357
        %v359 = vpop.xlane.xlu0 %358
        %v360 = vrot.slane %v359, 4
        %v361 = vadd.f32 %v359, %v360
        %v362 = vrot.slane %v361, 2
        %v363 = vadd.f32 %v361, %v362
        %v364 = vrot.slane %v363, 1
        %v365 = vadd.f32 %v363, %v364
        %s366 = vtos %v365
        %v367 = vsel %vm277, 1, 0
        %v368 = vcvt.s32.f32 %v367
        %v369 = vsel %vm316, %v368, 0.0
        %370 = vadd.xlane.f32.xlu0 %v369
        %v371 = vpop.xlane.xlu0 %370
        %v372 = vrot.slane %v371, 4
        %v373 = vadd.f32 %v371, %v372
        %v374 = vrot.slane %v373, 2
        %v375 = vadd.f32 %v373, %v374
        %v376 = vrot.slane %v375, 1
        %v377 = vadd.f32 %v375, %v376
        %s378 = vtos %v377
        %v379 = vsub.f32 %v273, %v272
        %v380 = vmul.f32 %v379, %v379
        %v381 = vsel %vm285, %v380, 0.0
        %382 = vadd.xlane.f32.xlu0 %v381
        %v383 = vpop.xlane.xlu0 %382
        %v384 = vrot.slane %v383, 4
        %v385 = vadd.f32 %v383, %v384
        %v386 = vrot.slane %v385, 2
        %v387 = vadd.f32 %v385, %v386
        %v388 = vrot.slane %v387, 1
        %v389 = vadd.f32 %v387, %v388
        %s390 = vtos %v389
        %v391 = vlaneseq
        %v392 = vand.u32 %v391, 127
        %vm393 = vcmp.eq.s32.totalorder %v392, 0
        %v394 = vstv %s326
        %v395 = vsel %vm393, %v394, 0.0
        %vm396 = vcmp.eq.s32.totalorder %v392, 1
        %v397 = vstv %s366
        %v398 = vsel %vm396, %v397, 0.0
        %v399 = vadd.f32 %v395, %v398
        %vm400 = vcmp.eq.s32.totalorder %v392, 2
        %v401 = vstv %s378
        %v402 = vsel %vm400, %v401, 0.0
        %v403 = vadd.f32 %v399, %v402
        %vm404 = vcmp.eq.s32.totalorder %v392, 3
        %v405 = vstv %s390
        %v406 = vsel %vm404, %v405, 0.0
        %v407 = vadd.f32 %v403, %v406
        %408 = vst [vmem:[%s264] sm:$0x1] %v407
        %s409 = sand.u32 %s129, 1
        %s410 = scalar_lea.sflag [#allocation4], %s409
        %s411 = sand.u32 %s129, 1
        %s412 = scalar_lea.vmem [#allocation7], %s411
        // Predicated region
        $region41: #{tpu_custom_call.1} parent=31 // pred_check
          %p413 = pneg %p139
        $region42: #{tpu_custom_call.1} parent=31 // pred_check_branch
          %415 = sbr.rel (%p413) target = $region44
        $region43: #{tpu_custom_call.1} parent=31 // pred_region
          %s417 = ssub.s32 16, 16
          %418 = vsyncadd %s410, %s417
          %s419 = smul.addr %s27, 2
          %s420 = sadd.s32 %s28, %s419
          %s421 = smul.addr %s420, 16
          %s422 = scalar_lea.hbm %s3, %s421
          %s424 = sshll.u32 %s412, 4
          %s425 = int_to_ptr.vmem [resolvable:$true] %s424
          %427 = dma.vmem_to_hbm [thread:$0]  %s425, 16, %s422, %s410
        $region44: #{tpu_custom_call.1} parent=31 // pred_fallthru
          _
      $region32: #{tpu_custom_call.1} parent=5 // pred_fallthru
        _
      %p428 = scmp.le.s32.totalorder 2, %s18
      // Predicated region
      $region45: #{tpu_custom_call.1} parent=5 // pred_check
        %p429 = pneg %p428
      $region46: #{tpu_custom_call.1} parent=5 // pred_check_branch
        %431 = sbr.rel (%p429) target = $region48
      $region47: #{tpu_custom_call.1} parent=5 // pred_region
        %s432 = ssub.s32 %s18, 2
        // Predicated region
        $region49: #{tpu_custom_call.1} parent=47 // pred_check
          %p433 = pneg %p145
        $region50: #{tpu_custom_call.1} parent=47 // pred_check_branch
          %435 = sbr.rel (%p433) target = $region52
        $region51: #{tpu_custom_call.1} parent=47 // pred_region
          %s436 = sand.u32 %s130, 1
          %s437 = scalar_lea.sflag [#allocation4], %s436
          %s438 = sand.u32 %s130, 1
          %s439 = scalar_lea.vmem [#allocation7], %s438
          %440 = dma.done %s437, 16
        $region52: #{tpu_custom_call.1} parent=47 // pred_fallthru
          _
      $region48: #{tpu_custom_call.1} parent=5 // pred_fallthru
        _
    $region6: #{tpu_custom_call.1} parent=1 // loop_footer
      %s22 = sadd.s32 1, %s18
    $region7: #{tpu_custom_call.1} parent=1 // loop_footer_branch
      %17 = sbr.rel target = $region3
    $region8: #{tpu_custom_call.1} parent=1 // loop_exit
      _
    %441 = vsyncpa [#allocation3], 1
    %s442 = scalar_lea.sflag [#allocation3], 1
    %443 = vsyncpa %s442, 1
    %444 = vsyncpa [#allocation6], 1
    %s445 = scalar_lea.sflag [#allocation6], 1
    %446 = vsyncpa %s445, 1
    %447 = vsyncpa [#allocation4], 1
    %s448 = scalar_lea.sflag [#allocation4], 1
    %449 = vsyncpa %s448, 1

</llo_original>
